<compile_context>
chip_gen: v7x
topology: tpu7x:2x2x1
jax: 0.10.0
libtpu: 0.0.40
codegen_flags: <defaults>
</compile_context>

<pallas_src>
import functools

import jax
import jax.numpy as jnp
from jax.experimental import pallas as pl
from jax.experimental.pallas import tpu as pltpu

LOG_STD_MAX = 2.0
LOG_STD_MIN = -5.0
HEAD_PAD = 128  # lane-dense fused head width (mean | logstd | zero padding)


def actor_kernel(x_ref, w1_ref, b1_ref, w2_ref, b2_ref, wh_ref, bh_ref,
                 out_ref, *, n_actions):
    x = x_ref[...]                                               # [TM, n_obs] f32

    # fc1 + relu
    h1 = jnp.dot(x, w1_ref[...], preferred_element_type=jnp.float32)
    h1 = jnp.maximum(h1 + b1_ref[...], 0.0)                      # [TM, H]

    # fc2 + relu
    h2 = jnp.dot(h1, w2_ref[...], preferred_element_type=jnp.float32)
    h2 = jnp.maximum(h2 + b2_ref[...], 0.0)                      # [TM, H]

    # Fused heads: single lane-dense matmul producing [TM, 128]
    #   cols [0, A)   -> mean
    #   cols [A, 2A)  -> raw logstd (tanh+rescale applied below)
    #   cols [2A, 128)-> zero padding (zero weights / zero bias)
    head = jnp.dot(h2, wh_ref[...], preferred_element_type=jnp.float32)
    head = head + bh_ref[...]                                    # [TM, 128]

    # tanh -> rescale into [LOG_STD_MIN, LOG_STD_MAX]; rides the EUP slot.
    ls = jnp.tanh(head)
    ls = LOG_STD_MIN + 0.5 * (LOG_STD_MAX - LOG_STD_MIN) * (ls + 1.0)

    # Select rescaled values only for the logstd columns; mean columns stay raw.
    col = jax.lax.broadcasted_iota(jnp.int32, head.shape, 1)
    is_logstd = jnp.logical_and(col >= n_actions, col < 2 * n_actions)
    out_ref[...] = jnp.where(is_logstd, ls, head)


def actor_forward(x, params, *, block_m=256):
    """Runs the Actor forward pass. x: [B, n_obs] f32. Returns (mean, log_std)."""
    B, n_obs = x.shape
    H = params["w1"].shape[1]
    A = params["wm"].shape[1]
    assert 2 * A <= HEAD_PAD, "fused head assumes 2*n_actions <= 128"

    # Pack the two heads into one lane-dense, zero-padded [H, 128] weight.
    wh = jnp.zeros((H, HEAD_PAD), jnp.float32)
    wh = wh.at[:, :A].set(params["wm"]).at[:, A:2 * A].set(params["wl"])
    bh = jnp.zeros((1, HEAD_PAD), jnp.float32)
    bh = bh.at[:, :A].set(params["bm"]).at[:, A:2 * A].set(params["bl"])

    # Batch tiling: TM rows per grid step, batch padded up to a multiple of TM.
    tm = min(block_m, max(8, ((B + 7) // 8) * 8))
    Bp = ((B + tm - 1) // tm) * tm
    xp = x if Bp == B else jnp.pad(x, ((0, Bp - B), (0, 0)))
    grid = (Bp // tm,)

    flops = 2 * Bp * (n_obs * H + H * H + H * HEAD_PAD)
    bytes_accessed = 4 * (xp.size + params["w1"].size + params["b1"].size
                          + params["w2"].size + params["b2"].size
                          + wh.size + bh.size + Bp * HEAD_PAD)
    cost = pl.CostEstimate(flops=flops,
                           transcendentals=Bp * HEAD_PAD,
                           bytes_accessed=bytes_accessed)

    kernel = functools.partial(actor_kernel, n_actions=A)

    out = pl.pallas_call(
        kernel,
        out_shape=jax.ShapeDtypeStruct((Bp, HEAD_PAD), jnp.float32),
        grid=grid,
        in_specs=[
            pl.BlockSpec((tm, n_obs), lambda i: (i, 0)),       # x tile
            pl.BlockSpec((n_obs, H), lambda i: (0, 0)),        # w1 (resident)
            pl.BlockSpec((1, H), lambda i: (0, 0)),            # b1
            pl.BlockSpec((H, H), lambda i: (0, 0)),            # w2
            pl.BlockSpec((1, H), lambda i: (0, 0)),            # b2
            pl.BlockSpec((H, HEAD_PAD), lambda i: (0, 0)),     # fused head W
            pl.BlockSpec((1, HEAD_PAD), lambda i: (0, 0)),     # fused head b
        ],
        out_specs=pl.BlockSpec((tm, HEAD_PAD), lambda i: (i, 0)),
        compiler_params=pltpu.CompilerParams(
            dimension_semantics=("parallel",)),
        cost_estimate=cost,
    )(xp, params["w1"], params["b1"], params["w2"], params["b2"], wh, bh)

    mean = out[:B, :A]
    log_std = out[:B, A:2 * A]
    return mean, log_std


def init_actor_params(key, n_obs=11, n_actions=3, hidden_size=128):
    """Deterministic init mirroring nn.Linear default (uniform +/- 1/sqrt(fan_in)).
    Weights stored as [in, out]; biases as [1, out] for clean VMEM broadcasting."""
    def linear(k, fan_in, fan_out):
        kw, kb = jax.random.split(k)
        bound = 1.0 / jnp.sqrt(float(fan_in))
        w = jax.random.uniform(kw, (fan_in, fan_out), jnp.float32, -bound, bound)
        b = jax.random.uniform(kb, (1, fan_out), jnp.float32, -bound, bound)
        return w, b

    k1, k2, k3, k4 = jax.random.split(key, 4)
    w1, b1 = linear(k1, n_obs, hidden_size)
    w2, b2 = linear(k2, hidden_size, hidden_size)
    wm, bm = linear(k3, hidden_size, n_actions)
    wl, bl = linear(k4, hidden_size, n_actions)
    return {"w1": w1, "b1": b1, "w2": w2, "b2": b2,
            "wm": wm, "bm": bm, "wl": wl, "bl": bl}


def actor_reference(x, params):
    """Pure-JAX reference matching the PyTorch forward exactly."""
    h1 = jnp.maximum(x @ params["w1"] + params["b1"], 0.0)
    h2 = jnp.maximum(h1 @ params["w2"] + params["b2"], 0.0)
    mean = h2 @ params["wm"] + params["bm"]
    ls = jnp.tanh(h2 @ params["wl"] + params["bl"])
    ls = LOG_STD_MIN + 0.5 * (LOG_STD_MAX - LOG_STD_MIN) * (ls + 1.0)
    return mean, ls


def _check(x, params, n_actions):
    mean, log_std = actor_forward(x, params)
    jax.block_until_ready((mean, log_std))
    ref_mean, ref_log_std = actor_reference(x, params)
    assert mean.shape == (x.shape[0], n_actions)
    assert log_std.shape == (x.shape[0], n_actions)
    assert jnp.allclose(mean, ref_mean, atol=1e-5, rtol=1e-5)
    assert jnp.allclose(log_std, ref_log_std, atol=1e-5, rtol=1e-5)
    assert bool(jnp.all(log_std >= LOG_STD_MIN)) and bool(jnp.all(log_std <= LOG_STD_MAX))


if __name__ == "__main__":
    n_obs, n_actions, hidden = 11, 3, 128

    key = jax.random.PRNGKey(0)
    k_x1, k_x2, k_p = jax.random.split(key, 3)
    params = init_actor_params(k_p, n_obs=n_obs, n_actions=n_actions,
                               hidden_size=hidden)

    # Small batch (single grid step, whole arrays resident in VMEM).
    x_small = jax.random.normal(k_x1, (8, n_obs), dtype=jnp.float32)
    _check(x_small, params, n_actions)

    # Larger ragged batch to exercise batch tiling + padding (grid of 2 steps).
    x_big = jax.random.normal(k_x2, (300, n_obs), dtype=jnp.float32)
    _check(x_big, params, n_actions)

    # TODO(synk): get_action() (rsample + tanh-squashed log_prob) involves
    # distribution sampling with host-side RNG; only the deterministic
    # forward() is implemented as a Pallas kernel.
    print("KERNEL_OK")
</pallas_src>

<mosaic_0001>
module attributes {stable_mosaic.version = 11 : i64} {
  func.func @actor_kernel(%arg0: i32, %arg1: memref<8x11xf32, #tpu.memory_space<vmem>>, %arg2: memref<11x128xf32, #tpu.memory_space<vmem>>, %arg3: memref<1x128xf32, #tpu.memory_space<vmem>>, %arg4: memref<128x128xf32, #tpu.memory_space<vmem>>, %arg5: memref<1x128xf32, #tpu.memory_space<vmem>>, %arg6: memref<128x128xf32, #tpu.memory_space<vmem>>, %arg7: memref<1x128xf32, #tpu.memory_space<vmem>>, %arg8: memref<8x128xf32, #tpu.memory_space<vmem>>) attributes {dimension_semantics = [#tpu.dimension_semantics<parallel>], iteration_bounds = array<i64: 1>, scalar_prefetch = 0 : i64, scratch_operands = 0 : i64, tpu.core_type = #tpu.core_type<tc>, window_params = [{transform_indices = @transform_0, window_bounds = array<i64: 8, 11>}, {pipeline_mode = #tpu.pipeline_mode<synchronous>, transform_indices = @transform_1, window_bounds = array<i64: 11, 128>}, {pipeline_mode = #tpu.pipeline_mode<synchronous>, transform_indices = @transform_2, window_bounds = array<i64: 1, 128>}, {pipeline_mode = #tpu.pipeline_mode<synchronous>, transform_indices = @transform_3, window_bounds = array<i64: 128, 128>}, {pipeline_mode = #tpu.pipeline_mode<synchronous>, transform_indices = @transform_4, window_bounds = array<i64: 1, 128>}, {pipeline_mode = #tpu.pipeline_mode<synchronous>, transform_indices = @transform_5, window_bounds = array<i64: 128, 128>}, {pipeline_mode = #tpu.pipeline_mode<synchronous>, transform_indices = @transform_6, window_bounds = array<i64: 1, 128>}, {transform_indices = @transform_7, window_bounds = array<i64: 8, 128>}]} {
    %c0 = arith.constant 0 : index
    %c0_0 = arith.constant 0 : index
    %0 = vector.load %arg1[%c0, %c0_0] : memref<8x11xf32, #tpu.memory_space<vmem>>, vector<8x11xf32>
    %c0_1 = arith.constant 0 : index
    %c0_2 = arith.constant 0 : index
    %1 = vector.load %arg2[%c0_1, %c0_2] : memref<11x128xf32, #tpu.memory_space<vmem>>, vector<11x128xf32>
    %cst = arith.constant dense<0.000000e+00> : vector<8x128xf32>
    %2 = tpu.matmul %0, %1, %cst {dimension_numbers = #tpu.dot_dimension_numbers<[1], [0], [0], [1], [0, 0, 1, 1], [], []>} : vector<8x11xf32>, vector<11x128xf32>, vector<8x128xf32> -> vector<8x128xf32>
    %c0_3 = arith.constant 0 : index
    %c0_4 = arith.constant 0 : index
    %3 = vector.load %arg3[%c0_3, %c0_4] : memref<1x128xf32, #tpu.memory_space<vmem>>, vector<1x128xf32>
    %4 = vector.broadcast %3 : vector<1x128xf32> to vector<8x128xf32>
    %5 = arith.addf %2, %4 : vector<8x128xf32>
    %cst_5 = arith.constant 0.000000e+00 : f32
    %6 = vector.broadcast %cst_5 : f32 to vector<8x128xf32>
    %7 = arith.maximumf %5, %6 : vector<8x128xf32>
    %c0_6 = arith.constant 0 : index
    %c0_7 = arith.constant 0 : index
    %8 = vector.load %arg4[%c0_6, %c0_7] : memref<128x128xf32, #tpu.memory_space<vmem>>, vector<128x128xf32>
    %cst_8 = arith.constant dense<0.000000e+00> : vector<8x128xf32>
    %9 = tpu.matmul %7, %8, %cst_8 {dimension_numbers = #tpu.dot_dimension_numbers<[1], [0], [0], [1], [0, 0, 1, 1], [], []>} : vector<8x128xf32>, vector<128x128xf32>, vector<8x128xf32> -> vector<8x128xf32>
    %c0_9 = arith.constant 0 : index
    %c0_10 = arith.constant 0 : index
    %10 = vector.load %arg5[%c0_9, %c0_10] : memref<1x128xf32, #tpu.memory_space<vmem>>, vector<1x128xf32>
    %11 = vector.broadcast %10 : vector<1x128xf32> to vector<8x128xf32>
    %12 = arith.addf %9, %11 : vector<8x128xf32>
    %cst_11 = arith.constant 0.000000e+00 : f32
    %13 = vector.broadcast %cst_11 : f32 to vector<8x128xf32>
    %14 = arith.maximumf %12, %13 : vector<8x128xf32>
    %c0_12 = arith.constant 0 : index
    %c0_13 = arith.constant 0 : index
    %15 = vector.load %arg6[%c0_12, %c0_13] : memref<128x128xf32, #tpu.memory_space<vmem>>, vector<128x128xf32>
    %cst_14 = arith.constant dense<0.000000e+00> : vector<8x128xf32>
    %16 = tpu.matmul %14, %15, %cst_14 {dimension_numbers = #tpu.dot_dimension_numbers<[1], [0], [0], [1], [0, 0, 1, 1], [], []>} : vector<8x128xf32>, vector<128x128xf32>, vector<8x128xf32> -> vector<8x128xf32>
    %c0_15 = arith.constant 0 : index
    %c0_16 = arith.constant 0 : index
    %17 = vector.load %arg7[%c0_15, %c0_16] : memref<1x128xf32, #tpu.memory_space<vmem>>, vector<1x128xf32>
    %18 = vector.broadcast %17 : vector<1x128xf32> to vector<8x128xf32>
    %19 = arith.addf %16, %18 : vector<8x128xf32>
    %20 = math.tanh %19 : vector<8x128xf32>
    %cst_17 = arith.constant 1.000000e+00 : f32
    %21 = vector.broadcast %cst_17 : f32 to vector<8x128xf32>
    %22 = arith.addf %20, %21 : vector<8x128xf32>
    %cst_18 = arith.constant 3.500000e+00 : f32
    %23 = vector.broadcast %cst_18 : f32 to vector<8x128xf32>
    %24 = arith.mulf %23, %22 : vector<8x128xf32>
    %cst_19 = arith.constant -5.000000e+00 : f32
    %25 = vector.broadcast %cst_19 : f32 to vector<8x128xf32>
    %26 = arith.addf %25, %24 : vector<8x128xf32>
    %27 = tpu.iota {dimensions = array<i32: 1>} : vector<8x128xi32>
    %c3_i32 = arith.constant 3 : i32
    %28 = vector.broadcast %c3_i32 : i32 to vector<8x128xi32>
    %29 = arith.cmpi sge, %27, %28 : vector<8x128xi32>
    %c6_i32 = arith.constant 6 : i32
    %30 = vector.broadcast %c6_i32 : i32 to vector<8x128xi32>
    %31 = arith.cmpi slt, %27, %30 : vector<8x128xi32>
    %32 = arith.andi %29, %31 : vector<8x128xi1>
    %33 = arith.select %32, %26, %19 : vector<8x128xi1>, vector<8x128xf32>
    %c0_20 = arith.constant 0 : index
    %c0_21 = arith.constant 0 : index
    %34 = vector.load %arg8[%c0_20, %c0_21] : memref<8x128xf32, #tpu.memory_space<vmem>>, vector<8x128xf32>
    tpu.vector_store %arg8[%c0_20, %c0_21], %33 {strides = array<i32>} : memref<8x128xf32, #tpu.memory_space<vmem>>, vector<8x128xf32>,
    return
  }
  func.func @transform_0(%arg0: i32) -> (i32, i32) {
    %c0_i32 = arith.constant 0 : i32
    %c0_i32_0 = arith.constant 0 : i32
    return %arg0, %c0_i32 : i32, i32
  }
  func.func @transform_1(%arg0: i32) -> (i32, i32) {
    %c0_i32 = arith.constant 0 : i32
    %c0_i32_0 = arith.constant 0 : i32
    %c0_i32_1 = arith.constant 0 : i32
    return %c0_i32, %c0_i32_0 : i32, i32
  }
  func.func @transform_2(%arg0: i32) -> (i32, i32) {
    %c0_i32 = arith.constant 0 : i32
    %c0_i32_0 = arith.constant 0 : i32
    %c0_i32_1 = arith.constant 0 : i32
    return %c0_i32, %c0_i32_0 : i32, i32
  }
  func.func @transform_3(%arg0: i32) -> (i32, i32) {
    %c0_i32 = arith.constant 0 : i32
    %c0_i32_0 = arith.constant 0 : i32
    %c0_i32_1 = arith.constant 0 : i32
    return %c0_i32, %c0_i32_0 : i32, i32
  }
  func.func @transform_4(%arg0: i32) -> (i32, i32) {
    %c0_i32 = arith.constant 0 : i32
    %c0_i32_0 = arith.constant 0 : i32
    %c0_i32_1 = arith.constant 0 : i32
    return %c0_i32, %c0_i32_0 : i32, i32
  }
  func.func @transform_5(%arg0: i32) -> (i32, i32) {
    %c0_i32 = arith.constant 0 : i32
    %c0_i32_0 = arith.constant 0 : i32
    %c0_i32_1 = arith.constant 0 : i32
    return %c0_i32, %c0_i32_0 : i32, i32
  }
  func.func @transform_6(%arg0: i32) -> (i32, i32) {
    %c0_i32 = arith.constant 0 : i32
    %c0_i32_0 = arith.constant 0 : i32
    %c0_i32_1 = arith.constant 0 : i32
    return %c0_i32, %c0_i32_0 : i32, i32
  }
  func.func @transform_7(%arg0: i32) -> (i32, i32) {
    %c0_i32 = arith.constant 0 : i32
    %c0_i32_0 = arith.constant 0 : i32
    return %arg0, %c0_i32 : i32, i32
  }
}

</mosaic_0001>

<llo_original>
// kernel: tpu_custom_call.1
$region0: #{tpu_custom_call.1}
  #allocation0 [shape = 'u32[]', space=smem, size = 0x4, offset = 0x4, fixed_abs, tag = 'smem constant byte address 0x4 - core index']
  #allocation1 [shape = 'u32[144,128]{1,0:T(1,128)}', space=vmem, size = 0x12000, scoped, tag = 'internal scratch']
  %s0 = inlined_call_operand.hbm [shape: f32[8,11], index: 0, kind: input, shape index: {}]
  %s1 = inlined_call_operand.hbm [shape: f32[11,128], index: 1, kind: input, shape index: {}]
  %s2 = inlined_call_operand.vmem [shape: f32[1,128], index: 2, kind: input, shape index: {}]
  %s3 = inlined_call_operand.hbm [shape: f32[128,128], index: 3, kind: input, shape index: {}]
  %s4 = inlined_call_operand.vmem [shape: f32[1,128], index: 4, kind: input, shape index: {}]
  %s5 = inlined_call_operand.hbm [shape: f32[128,128], index: 5, kind: input, shape index: {}]
  %s6 = inlined_call_operand.vmem [shape: f32[1,128], index: 6, kind: input, shape index: {}]
  %s7 = inlined_call_operand.hbm [shape: f32[8,128], index: 7, kind: output, shape index: {}]
  %s8 = sld [smem:[#allocation0]]
  $region54: #{tpu_custom_call.1} parent=0
    _
  %s10 = ssub.s32 1, %s8
  %s11 = scalar_select 0, %s10, %s8
  $region1: #{tpu_custom_call.1} parent=0
    #allocation2 [shape = 'u8[4096]{0}', space=vmem, size = 0x1000, scoped, tag = 'input window, operand 0, single buffered']
    #allocation3 [shape = 's32[1]{0}', space=sflag, size = 0x4, scoped, tag = 'scoped memory for tpu_custom_call.1']
    #allocation4 [shape = 's32[1]{0}', space=sflag, size = 0x4, scoped, tag = 'scoped memory for tpu_custom_call.1']
    #allocation5 [shape = 'u8[8192]{0}', space=vmem, size = 0x2000, scoped, tag = 'input window, operand 1, single buffered']
    #allocation6 [shape = 's32[1]{0}', space=sflag, size = 0x4, scoped, tag = 'scoped memory for tpu_custom_call.1']
    #allocation7 [shape = 'u8[65536]{0}', space=vmem, size = 0x10000, scoped, tag = 'input window, operand 3, single buffered']
    #allocation8 [shape = 'u8[65536]{0}', space=vmem, size = 0x10000, scoped, tag = 'input window, operand 5, single buffered']
    #allocation9 [shape = 's32[1]{0}', space=sflag, size = 0x4, scoped, tag = 'scoped memory for tpu_custom_call.1']
    #allocation10 [shape = 'u8[4096]{0}', space=vmem, size = 0x1000, scoped, tag = 'output window, operand 0, single buffered']
    %12 = vsyncpa [#allocation3], 0
    %13 = vsyncpa [#allocation6], 0
    %14 = vsyncpa [#allocation9], 0
    %15 = vsyncpa [#allocation4], 0
    // Predicated region
    $region2: #{tpu_custom_call.1} parent=1 // pred_check
      _
    $region3: #{tpu_custom_call.1} parent=1 // pred_check_branch
      %17 = sbr.rel (0) target = $region5
    $region4: #{tpu_custom_call.1} parent=1 // pred_region
      %s19 = ssub.s32 128, 128
      %20 = vsyncadd [#allocation3], %s19
      %s22 = sshll.u32 [#allocation2], 4
      %s23 = int_to_ptr.vmem [resolvable:$true] %s22
      %25 = dma.hbm_to_vmem [thread:$0]  %s0, 128, %s23, [#allocation3]
    $region5: #{tpu_custom_call.1} parent=1 // pred_fallthru
      _
    // Predicated region
    $region6: #{tpu_custom_call.1} parent=1 // pred_check
      _
    $region7: #{tpu_custom_call.1} parent=1 // pred_check_branch
      %27 = sbr.rel (0) target = $region9
    $region8: #{tpu_custom_call.1} parent=1 // pred_region
      %s29 = ssub.s32 256, 256
      %30 = vsyncadd [#allocation6], %s29
      %s31 = sshll.u32 [#allocation5], 4
      %s32 = int_to_ptr.vmem [resolvable:$true] %s31
      %37 = dma.hbm_to_vmem [thread:$0]  %s1, 256, %s32, [#allocation6], 128, 128, 8
    $region9: #{tpu_custom_call.1} parent=1 // pred_fallthru
      _
    // Predicated region
    $region10: #{tpu_custom_call.1} parent=1 // pred_check
      _
    $region11: #{tpu_custom_call.1} parent=1 // pred_check_branch
      %39 = sbr.rel (0) target = $region13
    $region12: #{tpu_custom_call.1} parent=1 // pred_region
      _
    $region13: #{tpu_custom_call.1} parent=1 // pred_fallthru
      _
    // Predicated region
    $region14: #{tpu_custom_call.1} parent=1 // pred_check
      _
    $region15: #{tpu_custom_call.1} parent=1 // pred_check_branch
      %41 = sbr.rel (0) target = $region17
    $region16: #{tpu_custom_call.1} parent=1 // pred_region
      %s43 = ssub.s32 2048, 2048
      %44 = vsyncadd [#allocation6], %s43
      %s45 = sshll.u32 [#allocation7], 4
      %s46 = int_to_ptr.vmem [resolvable:$true] %s45
      %51 = dma.hbm_to_vmem [thread:$0]  %s3, 2048, %s46, [#allocation6], 128, 128, 8
    $region17: #{tpu_custom_call.1} parent=1 // pred_fallthru
      _
    // Predicated region
    $region18: #{tpu_custom_call.1} parent=1 // pred_check
      _
    $region19: #{tpu_custom_call.1} parent=1 // pred_check_branch
      %53 = sbr.rel (0) target = $region21
    $region20: #{tpu_custom_call.1} parent=1 // pred_region
      _
    $region21: #{tpu_custom_call.1} parent=1 // pred_fallthru
      _
    // Predicated region
    $region22: #{tpu_custom_call.1} parent=1 // pred_check
      _
    $region23: #{tpu_custom_call.1} parent=1 // pred_check_branch
      %55 = sbr.rel (0) target = $region25
    $region24: #{tpu_custom_call.1} parent=1 // pred_region
      %s57 = ssub.s32 2048, 2048
      %58 = vsyncadd [#allocation9], %s57
      %s59 = sshll.u32 [#allocation8], 4
      %s60 = int_to_ptr.vmem [resolvable:$true] %s59
      %65 = dma.hbm_to_vmem [thread:$0]  %s5, 2048, %s60, [#allocation9], 128, 128, 8
    $region25: #{tpu_custom_call.1} parent=1 // pred_fallthru
      _
    // Predicated region
    $region26: #{tpu_custom_call.1} parent=1 // pred_check
      _
    $region27: #{tpu_custom_call.1} parent=1 // pred_check_branch
      %67 = sbr.rel (0) target = $region29
    $region28: #{tpu_custom_call.1} parent=1 // pred_region
      _
    $region29: #{tpu_custom_call.1} parent=1 // pred_fallthru
      _
    // Predicated region
    $region30: #{tpu_custom_call.1} parent=1 // pred_check
      _
    $region31: #{tpu_custom_call.1} parent=1 // pred_check_branch
      %69 = sbr.rel (0) target = $region33
    $region32: #{tpu_custom_call.1} parent=1 // pred_region
      %70 = dma.done [#allocation3], 128
    $region33: #{tpu_custom_call.1} parent=1 // pred_fallthru
      _
    // Predicated region
    $region34: #{tpu_custom_call.1} parent=1 // pred_check
      _
    $region35: #{tpu_custom_call.1} parent=1 // pred_check_branch
      %72 = sbr.rel (0) target = $region37
    $region36: #{tpu_custom_call.1} parent=1 // pred_region
      %73 = dma.done [#allocation6], 256
    $region37: #{tpu_custom_call.1} parent=1 // pred_fallthru
      _
    // Predicated region
    $region38: #{tpu_custom_call.1} parent=1 // pred_check
      _
    $region39: #{tpu_custom_call.1} parent=1 // pred_check_branch
      %75 = sbr.rel (0) target = $region41
    $region40: #{tpu_custom_call.1} parent=1 // pred_region
      %76 = dma.done [#allocation6], 2048
    $region41: #{tpu_custom_call.1} parent=1 // pred_fallthru
      _
    // Predicated region
    $region42: #{tpu_custom_call.1} parent=1 // pred_check
      _
    $region43: #{tpu_custom_call.1} parent=1 // pred_check_branch
      %78 = sbr.rel (0) target = $region45
    $region44: #{tpu_custom_call.1} parent=1 // pred_region
      %79 = dma.done [#allocation9], 2048
    $region45: #{tpu_custom_call.1} parent=1 // pred_fallthru
      _
    %v80 = vld [vmem:[#allocation2] sm:$0xff]
    %v81 = vld [vmem:[#allocation5] sm:$0xff]
    %v82 = vld [vmem:[#allocation5 + $0x8] sm:$0x7]
    %v83 = vld [vmem:[%s2] sm:$0x1]
    %v85 = vlaneseq
    %v86 = vshrl.u32 %v85, 7
    %v87 = vsub.s32 0, %v86
    %v88 = vrot.slane %v83, %v87
    %vm90 = vcmask 89088
    %v92 = vsel %vm90, %v80, 0
    %vm94 = vcmask 1042432
    %v96 = vsel %vm94, %v82, 0
    %98 = vmatprep.subr.mxu0 0.0
    %99 = vmatpush1.msra.mxu0 %v81
    %100 = vmatprep.subr.mxu0 0.0
    %101 = vmatpush1.msra.mxu0 %v96
    %102 = vmatprep.subr.mxu0 0.0
    %103 = vmatpush1.msra.mxu0 0.0
    %104 = vmatprep.subr.mxu0 0.0
    %105 = vmatpush1.msra.mxu0 0.0
    %106 = vmatprep.subr.mxu0 0.0
    %107 = vmatpush1.msra.mxu0 0.0
    %108 = vmatprep.subr.mxu0 0.0
    %109 = vmatpush1.msra.mxu0 0.0
    %110 = vmatprep.subr.mxu0 0.0
    %111 = vmatpush1.msra.mxu0 0.0
    %112 = vmatprep.subr.mxu0 0.0
    %113 = vmatpush1.msra.mxu0 0.0
    %114 = vmatprep.subr.mxu0 0.0
    %115 = vmatpush1.msra.mxu0 0.0
    %116 = vmatprep.subr.mxu0 0.0
    %117 = vmatpush1.msra.mxu0 0.0
    %118 = vmatprep.subr.mxu0 0.0
    %119 = vmatpush1.msra.mxu0 0.0
    %120 = vmatprep.subr.mxu0 0.0
    %121 = vmatpush1.msra.mxu0 0.0
    %122 = vmatprep.subr.mxu0 0.0
    %123 = vmatpush1.msra.mxu0 0.0
    %124 = vmatprep.subr.mxu0 0.0
    %125 = vmatpush1.msra.mxu0 0.0
    %126 = vmatprep.subr.mxu0 0.0
    %127 = vmatpush1.msra.mxu0 0.0
    %128 = vmatprep.subr.mxu0 0.0
    %129 = vmatpush1.msra.mxu0 0.0
    %130 = vmatprep.subr.mxu0 0.0
    %131 = vmatpush1.msra.mxu0 0.0
    %132 = vmatprep.subr.mxu0 0.0
    %133 = vmatpush1.msra.mxu0 0.0
    %134 = vmatprep.subr.mxu0 0.0
    %135 = vmatpush1.msra.mxu0 0.0
    %136 = vmatprep.subr.mxu0 0.0
    %137 = vmatpush1.msra.mxu0 0.0
    %138 = vmatprep.subr.mxu0 0.0
    %139 = vmatpush1.msra.mxu0 0.0
    %140 = vmatprep.subr.mxu0 0.0
    %141 = vmatpush1.msra.mxu0 0.0
    %142 = vmatprep.subr.mxu0 0.0
    %143 = vmatpush1.msra.mxu0 0.0
    %144 = vmatprep.subr.mxu0 0.0
    %145 = vmatpush1.msra.mxu0 0.0
    %146 = vmatprep.subr.mxu0 0.0
    %147 = vmatpush1.msra.mxu0 0.0
    %148 = vmatprep.subr.mxu0 0.0
    %149 = vmatpush1.msra.mxu0 0.0
    %150 = vmatprep.subr.mxu0 0.0
    %151 = vmatpush1.msra.mxu0 0.0
    %152 = vmatprep.subr.mxu0 0.0
    %153 = vmatpush1.msra.mxu0 0.0
    %154 = vmatprep.subr.mxu0 0.0
    %155 = vmatpush1.msra.mxu0 0.0
    %156 = vmatprep.subr.mxu0 0.0
    %157 = vmatpush1.msra.mxu0 0.0
    %158 = vmatprep.subr.mxu0 0.0
    %159 = vmatpush1.msra.mxu0 0.0
    %160 = vmatprep.subr.mxu0 0.0
    %161 = vmatpush1.msra.mxu0 0.0
    %162 = vmatprep.mubr.f32.mxu0 0.0
    %163 = vmatmul.mubr.f32.gmra.mrb[0].mxu0 %v92
    %v164 = vpop.f32.mrb[0].mxu0
    %v165 = vadd.f32 %v88, %v164
    %v166 = vpop.f32.mrb[0].mxu0
    %167 = vdwg.mxu0
    %v168 = vmax.f32 %v165, 0.0
    %v169 = vld [vmem:[#allocation7] sm:$0xff]
    %v170 = vld [vmem:[#allocation7 + $0x8] sm:$0xff]
    %v171 = vld [vmem:[#allocation7 + $0x10] sm:$0xff]
    %v172 = vld [vmem:[#allocation7 + $0x18] sm:$0xff]
    %v173 = vld [vmem:[#allocation7 + $0x20] sm:$0xff]
    %v174 = vld [vmem:[#allocation7 + $0x28] sm:$0xff]
    %v175 = vld [vmem:[#allocation7 + $0x30] sm:$0xff]
    %v176 = vld [vmem:[#allocation7 + $0x38] sm:$0xff]
    %v177 = vld [vmem:[#allocation7 + $0x40] sm:$0xff]
    %v178 = vld [vmem:[#allocation7 + $0x48] sm:$0xff]
    %v179 = vld [vmem:[#allocation7 + $0x50] sm:$0xff]
    %v180 = vld [vmem:[#allocation7 + $0x58] sm:$0xff]
    %v181 = vld [vmem:[#allocation7 + $0x60] sm:$0xff]
    %v182 = vld [vmem:[#allocation7 + $0x68] sm:$0xff]
    %v183 = vld [vmem:[#allocation7 + $0x70] sm:$0xff]
    %v184 = vld [vmem:[#allocation7 + $0x78] sm:$0xff]
    %v185 = vld [vmem:[%s4] sm:$0x1]
    %v187 = vlaneseq
    %v188 = vshrl.u32 %v187, 7
    %v189 = vsub.s32 0, %v188
    %v190 = vrot.slane %v185, %v189
    %192 = vmatprep.subr.mxu0 0.0
    %193 = vmatpush1.msra.mxu0 %v169
    %194 = vmatprep.subr.mxu0 0.0
    %195 = vmatpush1.msra.mxu0 %v170
    %196 = vmatprep.subr.mxu0 0.0
    %197 = vmatpush1.msra.mxu0 %v171
    %198 = vmatprep.subr.mxu0 0.0
    %199 = vmatpush1.msra.mxu0 %v172
    %200 = vmatprep.subr.mxu0 0.0
    %201 = vmatpush1.msra.mxu0 %v173
    %202 = vmatprep.subr.mxu0 0.0
    %203 = vmatpush1.msra.mxu0 %v174
    %204 = vmatprep.subr.mxu0 0.0
    %205 = vmatpush1.msra.mxu0 %v175
    %206 = vmatprep.subr.mxu0 0.0
    %207 = vmatpush1.msra.mxu0 %v176
    %208 = vmatprep.subr.mxu0 0.0
    %209 = vmatpush1.msra.mxu0 %v177
    %210 = vmatprep.subr.mxu0 0.0
    %211 = vmatpush1.msra.mxu0 %v178
    %212 = vmatprep.subr.mxu0 0.0
    %213 = vmatpush1.msra.mxu0 %v179
    %214 = vmatprep.subr.mxu0 0.0
    %215 = vmatpush1.msra.mxu0 %v180
    %216 = vmatprep.subr.mxu0 0.0
    %217 = vmatpush1.msra.mxu0 %v181
    %218 = vmatprep.subr.mxu0 0.0
    %219 = vmatpush1.msra.mxu0 %v182
    %220 = vmatprep.subr.mxu0 0.0
    %221 = vmatpush1.msra.mxu0 %v183
    %222 = vmatprep.subr.mxu0 0.0
    %223 = vmatpush1.msra.mxu0 %v184
    %224 = vmatprep.subr.mxu0 0.0
    %225 = vmatpush1.msra.mxu0 0.0
    %226 = vmatprep.subr.mxu0 0.0
    %227 = vmatpush1.msra.mxu0 0.0
    %228 = vmatprep.subr.mxu0 0.0
    %229 = vmatpush1.msra.mxu0 0.0
    %230 = vmatprep.subr.mxu0 0.0
    %231 = vmatpush1.msra.mxu0 0.0
    %232 = vmatprep.subr.mxu0 0.0
    %233 = vmatpush1.msra.mxu0 0.0
    %234 = vmatprep.subr.mxu0 0.0
    %235 = vmatpush1.msra.mxu0 0.0
    %236 = vmatprep.subr.mxu0 0.0
    %237 = vmatpush1.msra.mxu0 0.0
    %238 = vmatprep.subr.mxu0 0.0
    %239 = vmatpush1.msra.mxu0 0.0
    %240 = vmatprep.subr.mxu0 0.0
    %241 = vmatpush1.msra.mxu0 0.0
    %242 = vmatprep.subr.mxu0 0.0
    %243 = vmatpush1.msra.mxu0 0.0
    %244 = vmatprep.subr.mxu0 0.0
    %245 = vmatpush1.msra.mxu0 0.0
    %246 = vmatprep.subr.mxu0 0.0
    %247 = vmatpush1.msra.mxu0 0.0
    %248 = vmatprep.subr.mxu0 0.0
    %249 = vmatpush1.msra.mxu0 0.0
    %250 = vmatprep.subr.mxu0 0.0
    %251 = vmatpush1.msra.mxu0 0.0
    %252 = vmatprep.subr.mxu0 0.0
    %253 = vmatpush1.msra.mxu0 0.0
    %254 = vmatprep.subr.mxu0 0.0
    %255 = vmatpush1.msra.mxu0 0.0
    %256 = vmatprep.mubr.f32.mxu0 0.0
    %257 = vmatmul.mubr.f32.gmra.mrb[0].mxu0 %v168
    %v258 = vpop.f32.mrb[0].mxu0
    %v259 = vadd.f32 %v190, %v258
    %v260 = vpop.f32.mrb[0].mxu0
    %261 = vdwg.mxu0
    %v262 = vmax.f32 %v259, 0.0
    %v263 = vld [vmem:[#allocation8] sm:$0xff]
    %v264 = vld [vmem:[#allocation8 + $0x8] sm:$0xff]
    %v265 = vld [vmem:[#allocation8 + $0x10] sm:$0xff]
    %v266 = vld [vmem:[#allocation8 + $0x18] sm:$0xff]
    %v267 = vld [vmem:[#allocation8 + $0x20] sm:$0xff]
    %v268 = vld [vmem:[#allocation8 + $0x28] sm:$0xff]
    %v269 = vld [vmem:[#allocation8 + $0x30] sm:$0xff]
    %v270 = vld [vmem:[#allocation8 + $0x38] sm:$0xff]
    %v271 = vld [vmem:[#allocation8 + $0x40] sm:$0xff]
    %v272 = vld [vmem:[#allocation8 + $0x48] sm:$0xff]
    %v273 = vld [vmem:[#allocation8 + $0x50] sm:$0xff]
    %v274 = vld [vmem:[#allocation8 + $0x58] sm:$0xff]
    %v275 = vld [vmem:[#allocation8 + $0x60] sm:$0xff]
    %v276 = vld [vmem:[#allocation8 + $0x68] sm:$0xff]
    %v277 = vld [vmem:[#allocation8 + $0x70] sm:$0xff]
    %v278 = vld [vmem:[#allocation8 + $0x78] sm:$0xff]
    %v279 = vld [vmem:[%s6] sm:$0x1]
    %v281 = vlaneseq
    %v282 = vshrl.u32 %v281, 7
    %v283 = vsub.s32 0, %v282
    %v284 = vrot.slane %v279, %v283
    %286 = vmatprep.subr.mxu0 0.0
    %287 = vmatpush1.msra.mxu0 %v263
    %288 = vmatprep.subr.mxu0 0.0
    %289 = vmatpush1.msra.mxu0 %v264
    %290 = vmatprep.subr.mxu0 0.0
    %291 = vmatpush1.msra.mxu0 %v265
    %292 = vmatprep.subr.mxu0 0.0
    %293 = vmatpush1.msra.mxu0 %v266
    %294 = vmatprep.subr.mxu0 0.0
    %295 = vmatpush1.msra.mxu0 %v267
    %296 = vmatprep.subr.mxu0 0.0
    %297 = vmatpush1.msra.mxu0 %v268
    %298 = vmatprep.subr.mxu0 0.0
    %299 = vmatpush1.msra.mxu0 %v269
    %300 = vmatprep.subr.mxu0 0.0
    %301 = vmatpush1.msra.mxu0 %v270
    %302 = vmatprep.subr.mxu0 0.0
    %303 = vmatpush1.msra.mxu0 %v271
    %304 = vmatprep.subr.mxu0 0.0
    %305 = vmatpush1.msra.mxu0 %v272
    %306 = vmatprep.subr.mxu0 0.0
    %307 = vmatpush1.msra.mxu0 %v273
    %308 = vmatprep.subr.mxu0 0.0
    %309 = vmatpush1.msra.mxu0 %v274
    %310 = vmatprep.subr.mxu0 0.0
    %311 = vmatpush1.msra.mxu0 %v275
    %312 = vmatprep.subr.mxu0 0.0
    %313 = vmatpush1.msra.mxu0 %v276
    %314 = vmatprep.subr.mxu0 0.0
    %315 = vmatpush1.msra.mxu0 %v277
    %316 = vmatprep.subr.mxu0 0.0
    %317 = vmatpush1.msra.mxu0 %v278
    %318 = vmatprep.subr.mxu0 0.0
    %319 = vmatpush1.msra.mxu0 0.0
    %320 = vmatprep.subr.mxu0 0.0
    %321 = vmatpush1.msra.mxu0 0.0
    %322 = vmatprep.subr.mxu0 0.0
    %323 = vmatpush1.msra.mxu0 0.0
    %324 = vmatprep.subr.mxu0 0.0
    %325 = vmatpush1.msra.mxu0 0.0
    %326 = vmatprep.subr.mxu0 0.0
    %327 = vmatpush1.msra.mxu0 0.0
    %328 = vmatprep.subr.mxu0 0.0
    %329 = vmatpush1.msra.mxu0 0.0
    %330 = vmatprep.subr.mxu0 0.0
    %331 = vmatpush1.msra.mxu0 0.0
    %332 = vmatprep.subr.mxu0 0.0
    %333 = vmatpush1.msra.mxu0 0.0
    %334 = vmatprep.subr.mxu0 0.0
    %335 = vmatpush1.msra.mxu0 0.0
    %336 = vmatprep.subr.mxu0 0.0
    %337 = vmatpush1.msra.mxu0 0.0
    %338 = vmatprep.subr.mxu0 0.0
    %339 = vmatpush1.msra.mxu0 0.0
    %340 = vmatprep.subr.mxu0 0.0
    %341 = vmatpush1.msra.mxu0 0.0
    %342 = vmatprep.subr.mxu0 0.0
    %343 = vmatpush1.msra.mxu0 0.0
    %344 = vmatprep.subr.mxu0 0.0
    %345 = vmatpush1.msra.mxu0 0.0
    %346 = vmatprep.subr.mxu0 0.0
    %347 = vmatpush1.msra.mxu0 0.0
    %348 = vmatprep.subr.mxu0 0.0
    %349 = vmatpush1.msra.mxu0 0.0
    %350 = vmatprep.mubr.f32.mxu0 0.0
    %351 = vmatmul.mubr.f32.gmra.mrb[0].mxu0 %v262
    %v352 = vpop.f32.mrb[0].mxu0
    %v353 = vadd.f32 %v284, %v352
    %v354 = vpop.f32.mrb[0].mxu0
    %355 = vdwg.mxu0
    %v356 = vtanh.pop %v353
    %v357 = vadd.f32 %v356, 1.0
    %v358 = vmul.f32 %v357, 3.5
    %v359 = vadd.f32 %v358, -5.0
    %v360 = vlaneseq
    %v361 = vand.u32 %v360, 127
    %vm362 = vcmp.ge.s32.totalorder %v361, 3
    %vm363 = vcmp.lt.s32.totalorder %v361, 6
    %vm364 = vmand %vm362, %vm363
    %v365 = vsel %vm364, %v359, %v353
    %366 = vst [vmem:[#allocation10] sm:$0xff] %v365
    // Predicated region
    $region46: #{tpu_custom_call.1} parent=1 // pred_check
      _
    $region47: #{tpu_custom_call.1} parent=1 // pred_check_branch
      %368 = sbr.rel (0) target = $region49
    $region48: #{tpu_custom_call.1} parent=1 // pred_region
      %s370 = ssub.s32 128, 128
      %371 = vsyncadd [#allocation4], %s370
      %s373 = sshll.u32 [#allocation10], 4
      %s374 = int_to_ptr.vmem [resolvable:$true] %s373
      %376 = dma.vmem_to_hbm [thread:$0]  %s374, 128, %s7, [#allocation4]
    $region49: #{tpu_custom_call.1} parent=1 // pred_fallthru
      _
    // Predicated region
    $region50: #{tpu_custom_call.1} parent=1 // pred_check
      _
    $region51: #{tpu_custom_call.1} parent=1 // pred_check_branch
      %378 = sbr.rel (0) target = $region53
    $region52: #{tpu_custom_call.1} parent=1 // pred_region
      %379 = dma.done [#allocation4], 128
    $region53: #{tpu_custom_call.1} parent=1 // pred_fallthru
      _
    %380 = vsyncpa [#allocation3], 1
    %381 = vsyncpa [#allocation6], 1
    %382 = vsyncpa [#allocation9], 1
    %383 = vsyncpa [#allocation4], 1

</llo_original>
